<compile_context>
chip_gen: v5e
topology: v5e:2x2
jax: 0.10.0
libtpu: 0.0.40
codegen_flags: <defaults>
</compile_context>

<pallas_src>
import functools

import jax
import jax.numpy as jnp
from jax.experimental import pallas as pl
from jax.experimental.pallas import tpu as pltpu


def _round_up(x, m):
    return ((x + m - 1) // m) * m


def _hop_sum_kernel(x_ref, *out_refs, c_blocks, rem):
    """Hop-block partial sums.

    x_ref:       (c_blocks, hop, lane_tile)  input dtype
    out_refs[0]: (c_blocks, lane_tile)       f32, sum over the full hop block
    out_refs[1]: (c_blocks, lane_tile)       f32, sum over the first `rem`
                                             rows (only present when rem > 0)
    """
    p_ref = out_refs[0]
    q_ref = out_refs[1] if rem else None
    for i in range(c_blocks):                      # small static unroll (<=32)
        xi = x_ref[i].astype(jnp.float32)          # (hop, lane_tile)
        p_ref[pl.ds(i, 1), :] = jnp.sum(xi, axis=0, keepdims=True)
        if rem:
            q_ref[pl.ds(i, 1), :] = jnp.sum(xi[:rem], axis=0, keepdims=True)


def _frame_kernel(*refs, r_full, rem, frame_tile, threshold):
    """Combine hop-block partial sums into frames, threshold, mask, store."""
    if rem:
        p_ref, q_ref, ol_ref, o_ref = refs
    else:
        p_ref, ol_ref, o_ref = refs
        q_ref = None

    j = pl.program_id(1)
    base = j * frame_tile

    terms = [p_ref[pl.ds(base + k, frame_tile), :] for k in range(r_full)]
    if rem:
        terms.append(q_ref[pl.ds(base + r_full, frame_tile), :])
    acc = terms[0]
    for t in terms[1:]:
        acc = acc + t

    # torch.gt(sum, win_length // 2) -> float
    val = (acc > threshold).astype(jnp.float32)

    # make_pad_mask(olens, output, 1): zero frames with index >= olens[batch].
    fidx = base + jax.lax.broadcasted_iota(jnp.int32, (frame_tile, 1), 0)
    val = jnp.where(fidx < ol_ref[...], val, 0.0)

    o_ref[...] = val.astype(o_ref.dtype)


@functools.partial(jax.jit, static_argnames=("win_length", "hop_length",
                                             "center"))
def label_aggregate(inp, ilens=None, *, win_length=512, hop_length=128,
                    center=True):
    """Pallas TPU implementation of LabelAggregate.forward.

    Args:
      inp:   (B, Nsamples, Label_dim) array.
      ilens: optional (B,) int array of input lengths.
    Returns:
      (output, olens): output is (B, Frames, Label_dim) in inp.dtype,
      olens is (B,) int32 or None.
    """
    if not center:
        # TODO(synk): center=False leaves `nframe` undefined in the reference
        # PyTorch code (it would raise); only center=True is supported here.
        raise NotImplementedError("center=False is not supported")

    inp = jnp.asarray(inp)
    bs, max_length, label_dim = inp.shape
    pad = win_length // 2
    t_pad = max_length + 2 * pad
    nframe = (t_pad - win_length) // hop_length + 1
    r_full = win_length // hop_length      # full hop blocks per window
    rem = win_length % hop_length          # leftover rows of one more block

    # --- static tiling parameters --------------------------------------------
    bd = bs * label_dim
    bd_pad = _round_up(bd, 128)
    lane_tile = next(lt for lt in (512, 256, 128) if bd_pad % lt == 0)
    n_lane = bd_pad // lane_tile

    frame_tile = min(256, _round_up(nframe, 8))
    nframe_pad = _round_up(nframe, frame_tile)
    n_ftile = nframe_pad // frame_tile

    # hop blocks needed by (padded) frames, incl. the partial block if rem > 0
    n_hop_min = nframe_pad + r_full - 1 + (1 if rem else 0)
    itemsize = int(jnp.dtype(inp.dtype).itemsize)
    # ~4 MiB input block per grid step (double-buffered => well under VMEM).
    c_blocks = (4 << 20) // max(1, hop_length * lane_tile * itemsize)
    c_blocks = max(8, min(32, _round_up(max(1, c_blocks), 8)))
    if c_blocks >= n_hop_min:
        c_blocks = n_hop_min
    n_chunks = (n_hop_min + c_blocks - 1) // c_blocks
    n_hop_pad = n_chunks * c_blocks
    t2 = n_hop_pad * hop_length

    # --- glue: lane-dense (time, B*D) slab + center padding in one concat -----
    if pad <= max_length:
        x2 = jnp.transpose(inp, (1, 0, 2)).reshape(max_length, bd)
        if bd_pad > bd:
            x2 = jnp.pad(x2, ((0, 0), (0, bd_pad - bd)))
        pieces = [x2[:pad], x2, x2[max_length - pad:]] if pad > 0 else [x2]
        if t2 > t_pad:
            pieces.append(jnp.zeros((t2 - t_pad, bd_pad), x2.dtype))
        x2 = jnp.concatenate(pieces, axis=0) if len(pieces) > 1 else pieces[0]
        if t2 < t_pad:
            x2 = x2[:t2]      # dropped rows can never be inside a valid window
    else:
        # Rare pad > Nsamples case: reproduce the torch in-place copy ordering.
        padded = jnp.pad(inp, ((0, 0), (pad, pad), (0, 0)))
        padded = padded.at[:, :pad, :].set(padded[:, pad:2 * pad, :])
        padded = padded.at[:, t_pad - pad:t_pad, :].set(
            padded[:, t_pad - 2 * pad:t_pad - pad, :])
        x2 = jnp.transpose(padded, (1, 0, 2)).reshape(t_pad, bd)
        if bd_pad > bd:
            x2 = jnp.pad(x2, ((0, 0), (0, bd_pad - bd)))
        if t2 > t_pad:
            x2 = jnp.pad(x2, ((0, t2 - t_pad), (0, 0)))
        elif t2 < t_pad:
            x2 = x2[:t2]
    x3 = x2.reshape(n_hop_pad, hop_length, bd_pad)

    # --- olens / per-lane frame mask ------------------------------------------
    if ilens is not None:
        ilens = jnp.asarray(ilens, jnp.int32)
        olens = (ilens + 2 * pad - win_length) // hop_length + 1
        olens_k = olens
    else:
        olens = None
        olens_k = jnp.full((bs,), nframe, dtype=jnp.int32)
    ol_lane = jnp.repeat(olens_k, label_dim)
    ol_lane = jnp.pad(ol_lane, (0, bd_pad - bd)).reshape(1, bd_pad)

    # --- kernel 1: hop-block partial sums (the data-heavy pass) ---------------
    hop_out_shapes = [jax.ShapeDtypeStruct((n_hop_pad, bd_pad), jnp.float32)]
    hop_out_specs = [pl.BlockSpec((c_blocks, lane_tile), lambda i, l: (i, l))]
    if rem:
        hop_out_shapes.append(
            jax.ShapeDtypeStruct((n_hop_pad, bd_pad), jnp.float32))
        hop_out_specs.append(
            pl.BlockSpec((c_blocks, lane_tile), lambda i, l: (i, l)))

    partial_sums = pl.pallas_call(
        functools.partial(_hop_sum_kernel, c_blocks=c_blocks, rem=rem),
        out_shape=tuple(hop_out_shapes),
        grid=(n_chunks, n_lane),
        in_specs=[pl.BlockSpec((c_blocks, hop_length, lane_tile),
                               lambda i, l: (i, 0, l))],
        out_specs=tuple(hop_out_specs),
        compiler_params=pltpu.CompilerParams(
            dimension_semantics=("parallel", "parallel")),
    )(x3)
    if not isinstance(partial_sums, (tuple, list)):
        partial_sums = (partial_sums,)

    # --- kernel 2: combine partials, threshold, mask (tiny pass) --------------
    n_bufs = len(partial_sums)
    # Pick the widest lane tile keeping the resident partial-sum slab bounded.
    lt2 = next((lt for lt in (512, 256, 128)
                if bd_pad % lt == 0
                and n_bufs * n_hop_pad * lt * 4 <= (8 << 20)), 128)
    n_lane2 = bd_pad // lt2

    frame_inputs = list(partial_sums) + [ol_lane]
    frame_in_specs = (
        [pl.BlockSpec((n_hop_pad, lt2), lambda l, j: (0, l))
         for _ in partial_sums]
        + [pl.BlockSpec((1, lt2), lambda l, j: (0, l))])

    out2 = pl.pallas_call(
        functools.partial(_frame_kernel, r_full=r_full, rem=rem,
                          frame_tile=frame_tile,
                          threshold=float(win_length // 2)),
        out_shape=jax.ShapeDtypeStruct((nframe_pad, bd_pad), inp.dtype),
        grid=(n_lane2, n_ftile),
        in_specs=frame_in_specs,
        out_specs=pl.BlockSpec((frame_tile, lt2), lambda l, j: (j, l)),
        compiler_params=pltpu.CompilerParams(
            dimension_semantics=("parallel", "parallel")),
    )(*frame_inputs)

    out = out2[:nframe, :bd].reshape(nframe, bs, label_dim)
    out = jnp.transpose(out, (1, 0, 2))
    return out, olens


def _reference(inp, ilens, *, win_length, hop_length):
    """Pure-numpy reference mirroring the PyTorch code (center=True)."""
    import numpy as np
    x = np.asarray(inp, np.float64)
    bs, n, d = x.shape
    pad = win_length // 2
    t_pad = n + 2 * pad
    p = np.zeros((bs, t_pad, d), np.float64)
    p[:, pad:pad + n, :] = x
    p[:, :pad, :] = p[:, pad:2 * pad, :]
    p[:, t_pad - pad:, :] = p[:, t_pad - 2 * pad:t_pad - pad, :]
    nframe = (t_pad - win_length) // hop_length + 1
    out = np.zeros((bs, nframe, d), np.float64)
    for f in range(nframe):
        out[:, f, :] = p[:, f * hop_length:f * hop_length + win_length, :].sum(1)
    out = (out > (win_length // 2)).astype(np.float64)
    if ilens is not None:
        il = np.asarray(ilens) + 2 * pad
        ol = (il - win_length) // hop_length + 1
        for b in range(bs):
            out[b, ol[b]:, :] = 0.0
    return out.astype(np.asarray(inp).dtype)


if __name__ == "__main__":
    import numpy as np

    key = jax.random.PRNGKey(0)
    k1, k2 = jax.random.split(key)

    # Small, module-consistent shapes: (Batch, Nsamples, Label_dim)
    B, N, D = 2, 64, 32
    x = (jax.random.uniform(k1, (B, N, D)) > 0.5).astype(jnp.float32)
    ilens = jnp.array([64, 48], dtype=jnp.int32)

    # Case 1: win % hop == 0 (default-style config), with ilens masking.
    out, olens = label_aggregate(x, ilens, win_length=16, hop_length=4,
                                 center=True)
    out = jax.block_until_ready(out)
    ref = _reference(np.asarray(x), np.asarray(ilens), win_length=16,
                     hop_length=4)
    np.testing.assert_allclose(np.asarray(out), ref, atol=0, rtol=0)

    # Case 2: win % hop != 0 (exercises the partial-block path), no ilens.
    out2, _ = label_aggregate(x, None, win_length=10, hop_length=4,
                              center=True)
    out2 = jax.block_until_ready(out2)
    ref2 = _reference(np.asarray(x), None, win_length=10, hop_length=4)
    np.testing.assert_allclose(np.asarray(out2), ref2, atol=0, rtol=0)

    # Case 3: longer sequence -> multiple chunk steps and multiple frame tiles.
    B3, N3, D3 = 2, 1200, 8
    x3_in = (jax.random.uniform(k2, (B3, N3, D3)) > 0.5).astype(jnp.float32)
    ilens3 = jnp.array([1200, 900], dtype=jnp.int32)
    out3, _ = label_aggregate(x3_in, ilens3, win_length=16, hop_length=4,
                              center=True)
    out3 = jax.block_until_ready(out3)
    ref3 = _reference(np.asarray(x3_in), np.asarray(ilens3), win_length=16,
                      hop_length=4)
    np.testing.assert_allclose(np.asarray(out3), ref3, atol=0, rtol=0)

    print("KERNEL_OK")
</pallas_src>

<mosaic_0001>
module attributes {stable_mosaic.version = 11 : i64} {
  func.func @_hop_sum_kernel(%arg0: i32, %arg1: i32, %arg2: memref<27x4x128xf32, #tpu.memory_space<vmem>>, %arg3: memref<27x128xf32, #tpu.memory_space<vmem>>) attributes {dimension_semantics = [#tpu.dimension_semantics<parallel>, #tpu.dimension_semantics<parallel>], iteration_bounds = array<i64: 1, 1>, scalar_prefetch = 0 : i64, scratch_operands = 0 : i64, tpu.core_type = #tpu.core_type<tc>, window_params = [{transform_indices = @transform_0, window_bounds = array<i64: 27, 4, 128>}, {transform_indices = @transform_1, window_bounds = array<i64: 27, 128>}]} {
    %c0 = arith.constant 0 : index
    %c0_0 = arith.constant 0 : index
    %c0_1 = arith.constant 0 : index
    %0 = vector.load %arg2[%c0, %c0_0, %c0_1] : memref<27x4x128xf32, #tpu.memory_space<vmem>>, vector<1x4x128xf32>
    %1 = vector.shape_cast %0 : vector<1x4x128xf32> to vector<4x128xf32>
    %cst = arith.constant dense<0.000000e+00> : vector<128xf32>
    %2 = vector.multi_reduction <add>, %1, %cst [0] : vector<4x128xf32> to vector<128xf32>
    %3 = vector.shape_cast %2 : vector<128xf32> to vector<1x128xf32>
    %c0_2 = arith.constant 0 : index
    %c0_3 = arith.constant 0 : index
    %4 = vector.load %arg3[%c0_2, %c0_3] : memref<27x128xf32, #tpu.memory_space<vmem>>, vector<1x128xf32>
    tpu.vector_store %arg3[%c0_2, %c0_3], %3 {strides = array<i32>} : memref<27x128xf32, #tpu.memory_space<vmem>>, vector<1x128xf32>,
    %c1 = arith.constant 1 : index
    %c0_4 = arith.constant 0 : index
    %c0_5 = arith.constant 0 : index
    %5 = vector.load %arg2[%c1, %c0_4, %c0_5] : memref<27x4x128xf32, #tpu.memory_space<vmem>>, vector<1x4x128xf32>
    %6 = vector.shape_cast %5 : vector<1x4x128xf32> to vector<4x128xf32>
    %cst_6 = arith.constant dense<0.000000e+00> : vector<128xf32>
    %7 = vector.multi_reduction <add>, %6, %cst_6 [0] : vector<4x128xf32> to vector<128xf32>
    %8 = vector.shape_cast %7 : vector<128xf32> to vector<1x128xf32>
    %c1_7 = arith.constant 1 : index
    %c0_8 = arith.constant 0 : index
    %9 = vector.load %arg3[%c1_7, %c0_8] : memref<27x128xf32, #tpu.memory_space<vmem>>, vector<1x128xf32>
    tpu.vector_store %arg3[%c1_7, %c0_8], %8 {strides = array<i32>} : memref<27x128xf32, #tpu.memory_space<vmem>>, vector<1x128xf32>,
    %c2 = arith.constant 2 : index
    %c0_9 = arith.constant 0 : index
    %c0_10 = arith.constant 0 : index
    %10 = vector.load %arg2[%c2, %c0_9, %c0_10] : memref<27x4x128xf32, #tpu.memory_space<vmem>>, vector<1x4x128xf32>
    %11 = vector.shape_cast %10 : vector<1x4x128xf32> to vector<4x128xf32>
    %cst_11 = arith.constant dense<0.000000e+00> : vector<128xf32>
    %12 = vector.multi_reduction <add>, %11, %cst_11 [0] : vector<4x128xf32> to vector<128xf32>
    %13 = vector.shape_cast %12 : vector<128xf32> to vector<1x128xf32>
    %c2_12 = arith.constant 2 : index
    %c0_13 = arith.constant 0 : index
    %14 = vector.load %arg3[%c2_12, %c0_13] : memref<27x128xf32, #tpu.memory_space<vmem>>, vector<1x128xf32>
    tpu.vector_store %arg3[%c2_12, %c0_13], %13 {strides = array<i32>} : memref<27x128xf32, #tpu.memory_space<vmem>>, vector<1x128xf32>,
    %c3 = arith.constant 3 : index
    %c0_14 = arith.constant 0 : index
    %c0_15 = arith.constant 0 : index
    %15 = vector.load %arg2[%c3, %c0_14, %c0_15] : memref<27x4x128xf32, #tpu.memory_space<vmem>>, vector<1x4x128xf32>
    %16 = vector.shape_cast %15 : vector<1x4x128xf32> to vector<4x128xf32>
    %cst_16 = arith.constant dense<0.000000e+00> : vector<128xf32>
    %17 = vector.multi_reduction <add>, %16, %cst_16 [0] : vector<4x128xf32> to vector<128xf32>
    %18 = vector.shape_cast %17 : vector<128xf32> to vector<1x128xf32>
    %c3_17 = arith.constant 3 : index
    %c0_18 = arith.constant 0 : index
    %19 = vector.load %arg3[%c3_17, %c0_18] : memref<27x128xf32, #tpu.memory_space<vmem>>, vector<1x128xf32>
    tpu.vector_store %arg3[%c3_17, %c0_18], %18 {strides = array<i32>} : memref<27x128xf32, #tpu.memory_space<vmem>>, vector<1x128xf32>,
    %c4 = arith.constant 4 : index
    %c0_19 = arith.constant 0 : index
    %c0_20 = arith.constant 0 : index
    %20 = vector.load %arg2[%c4, %c0_19, %c0_20] : memref<27x4x128xf32, #tpu.memory_space<vmem>>, vector<1x4x128xf32>
    %21 = vector.shape_cast %20 : vector<1x4x128xf32> to vector<4x128xf32>
    %cst_21 = arith.constant dense<0.000000e+00> : vector<128xf32>
    %22 = vector.multi_reduction <add>, %21, %cst_21 [0] : vector<4x128xf32> to vector<128xf32>
    %23 = vector.shape_cast %22 : vector<128xf32> to vector<1x128xf32>
    %c4_22 = arith.constant 4 : index
    %c0_23 = arith.constant 0 : index
    %24 = vector.load %arg3[%c4_22, %c0_23] : memref<27x128xf32, #tpu.memory_space<vmem>>, vector<1x128xf32>
    tpu.vector_store %arg3[%c4_22, %c0_23], %23 {strides = array<i32>} : memref<27x128xf32, #tpu.memory_space<vmem>>, vector<1x128xf32>,
    %c5 = arith.constant 5 : index
    %c0_24 = arith.constant 0 : index
    %c0_25 = arith.constant 0 : index
    %25 = vector.load %arg2[%c5, %c0_24, %c0_25] : memref<27x4x128xf32, #tpu.memory_space<vmem>>, vector<1x4x128xf32>
    %26 = vector.shape_cast %25 : vector<1x4x128xf32> to vector<4x128xf32>
    %cst_26 = arith.constant dense<0.000000e+00> : vector<128xf32>
    %27 = vector.multi_reduction <add>, %26, %cst_26 [0] : vector<4x128xf32> to vector<128xf32>
    %28 = vector.shape_cast %27 : vector<128xf32> to vector<1x128xf32>
    %c5_27 = arith.constant 5 : index
    %c0_28 = arith.constant 0 : index
    %29 = vector.load %arg3[%c5_27, %c0_28] : memref<27x128xf32, #tpu.memory_space<vmem>>, vector<1x128xf32>
    tpu.vector_store %arg3[%c5_27, %c0_28], %28 {strides = array<i32>} : memref<27x128xf32, #tpu.memory_space<vmem>>, vector<1x128xf32>,
    %c6 = arith.constant 6 : index
    %c0_29 = arith.constant 0 : index
    %c0_30 = arith.constant 0 : index
    %30 = vector.load %arg2[%c6, %c0_29, %c0_30] : memref<27x4x128xf32, #tpu.memory_space<vmem>>, vector<1x4x128xf32>
    %31 = vector.shape_cast %30 : vector<1x4x128xf32> to vector<4x128xf32>
    %cst_31 = arith.constant dense<0.000000e+00> : vector<128xf32>
    %32 = vector.multi_reduction <add>, %31, %cst_31 [0] : vector<4x128xf32> to vector<128xf32>
    %33 = vector.shape_cast %32 : vector<128xf32> to vector<1x128xf32>
    %c6_32 = arith.constant 6 : index
    %c0_33 = arith.constant 0 : index
    %34 = vector.load %arg3[%c6_32, %c0_33] : memref<27x128xf32, #tpu.memory_space<vmem>>, vector<1x128xf32>
    tpu.vector_store %arg3[%c6_32, %c0_33], %33 {strides = array<i32>} : memref<27x128xf32, #tpu.memory_space<vmem>>, vector<1x128xf32>,
    %c7 = arith.constant 7 : index
    %c0_34 = arith.constant 0 : index
    %c0_35 = arith.constant 0 : index
    %35 = vector.load %arg2[%c7, %c0_34, %c0_35] : memref<27x4x128xf32, #tpu.memory_space<vmem>>, vector<1x4x128xf32>
    %36 = vector.shape_cast %35 : vector<1x4x128xf32> to vector<4x128xf32>
    %cst_36 = arith.constant dense<0.000000e+00> : vector<128xf32>
    %37 = vector.multi_reduction <add>, %36, %cst_36 [0] : vector<4x128xf32> to vector<128xf32>
    %38 = vector.shape_cast %37 : vector<128xf32> to vector<1x128xf32>
    %c7_37 = arith.constant 7 : index
    %c0_38 = arith.constant 0 : index
    %39 = vector.load %arg3[%c7_37, %c0_38] : memref<27x128xf32, #tpu.memory_space<vmem>>, vector<1x128xf32>
    tpu.vector_store %arg3[%c7_37, %c0_38], %38 {strides = array<i32>} : memref<27x128xf32, #tpu.memory_space<vmem>>, vector<1x128xf32>,
    %c8 = arith.constant 8 : index
    %c0_39 = arith.constant 0 : index
    %c0_40 = arith.constant 0 : index
    %40 = vector.load %arg2[%c8, %c0_39, %c0_40] : memref<27x4x128xf32, #tpu.memory_space<vmem>>, vector<1x4x128xf32>
    %41 = vector.shape_cast %40 : vector<1x4x128xf32> to vector<4x128xf32>
    %cst_41 = arith.constant dense<0.000000e+00> : vector<128xf32>
    %42 = vector.multi_reduction <add>, %41, %cst_41 [0] : vector<4x128xf32> to vector<128xf32>
    %43 = vector.shape_cast %42 : vector<128xf32> to vector<1x128xf32>
    %c8_42 = arith.constant 8 : index
    %c0_43 = arith.constant 0 : index
    %44 = vector.load %arg3[%c8_42, %c0_43] : memref<27x128xf32, #tpu.memory_space<vmem>>, vector<1x128xf32>
    tpu.vector_store %arg3[%c8_42, %c0_43], %43 {strides = array<i32>} : memref<27x128xf32, #tpu.memory_space<vmem>>, vector<1x128xf32>,
    %c9 = arith.constant 9 : index
    %c0_44 = arith.constant 0 : index
    %c0_45 = arith.constant 0 : index
    %45 = vector.load %arg2[%c9, %c0_44, %c0_45] : memref<27x4x128xf32, #tpu.memory_space<vmem>>, vector<1x4x128xf32>
    %46 = vector.shape_cast %45 : vector<1x4x128xf32> to vector<4x128xf32>
    %cst_46 = arith.constant dense<0.000000e+00> : vector<128xf32>
    %47 = vector.multi_reduction <add>, %46, %cst_46 [0] : vector<4x128xf32> to vector<128xf32>
    %48 = vector.shape_cast %47 : vector<128xf32> to vector<1x128xf32>
    %c9_47 = arith.constant 9 : index
    %c0_48 = arith.constant 0 : index
    %49 = vector.load %arg3[%c9_47, %c0_48] : memref<27x128xf32, #tpu.memory_space<vmem>>, vector<1x128xf32>
    tpu.vector_store %arg3[%c9_47, %c0_48], %48 {strides = array<i32>} : memref<27x128xf32, #tpu.memory_space<vmem>>, vector<1x128xf32>,
    %c10 = arith.constant 10 : index
    %c0_49 = arith.constant 0 : index
    %c0_50 = arith.constant 0 : index
    %50 = vector.load %arg2[%c10, %c0_49, %c0_50] : memref<27x4x128xf32, #tpu.memory_space<vmem>>, vector<1x4x128xf32>
    %51 = vector.shape_cast %50 : vector<1x4x128xf32> to vector<4x128xf32>
    %cst_51 = arith.constant dense<0.000000e+00> : vector<128xf32>
    %52 = vector.multi_reduction <add>, %51, %cst_51 [0] : vector<4x128xf32> to vector<128xf32>
    %53 = vector.shape_cast %52 : vector<128xf32> to vector<1x128xf32>
    %c10_52 = arith.constant 10 : index
    %c0_53 = arith.constant 0 : index
    %54 = vector.load %arg3[%c10_52, %c0_53] : memref<27x128xf32, #tpu.memory_space<vmem>>, vector<1x128xf32>
    tpu.vector_store %arg3[%c10_52, %c0_53], %53 {strides = array<i32>} : memref<27x128xf32, #tpu.memory_space<vmem>>, vector<1x128xf32>,
    %c11 = arith.constant 11 : index
    %c0_54 = arith.constant 0 : index
    %c0_55 = arith.constant 0 : index
    %55 = vector.load %arg2[%c11, %c0_54, %c0_55] : memref<27x4x128xf32, #tpu.memory_space<vmem>>, vector<1x4x128xf32>
    %56 = vector.shape_cast %55 : vector<1x4x128xf32> to vector<4x128xf32>
    %cst_56 = arith.constant dense<0.000000e+00> : vector<128xf32>
    %57 = vector.multi_reduction <add>, %56, %cst_56 [0] : vector<4x128xf32> to vector<128xf32>
    %58 = vector.shape_cast %57 : vector<128xf32> to vector<1x128xf32>
    %c11_57 = arith.constant 11 : index
    %c0_58 = arith.constant 0 : index
    %59 = vector.load %arg3[%c11_57, %c0_58] : memref<27x128xf32, #tpu.memory_space<vmem>>, vector<1x128xf32>
    tpu.vector_store %arg3[%c11_57, %c0_58], %58 {strides = array<i32>} : memref<27x128xf32, #tpu.memory_space<vmem>>, vector<1x128xf32>,
    %c12 = arith.constant 12 : index
    %c0_59 = arith.constant 0 : index
    %c0_60 = arith.constant 0 : index
    %60 = vector.load %arg2[%c12, %c0_59, %c0_60] : memref<27x4x128xf32, #tpu.memory_space<vmem>>, vector<1x4x128xf32>
    %61 = vector.shape_cast %60 : vector<1x4x128xf32> to vector<4x128xf32>
    %cst_61 = arith.constant dense<0.000000e+00> : vector<128xf32>
    %62 = vector.multi_reduction <add>, %61, %cst_61 [0] : vector<4x128xf32> to vector<128xf32>
    %63 = vector.shape_cast %62 : vector<128xf32> to vector<1x128xf32>
    %c12_62 = arith.constant 12 : index
    %c0_63 = arith.constant 0 : index
    %64 = vector.load %arg3[%c12_62, %c0_63] : memref<27x128xf32, #tpu.memory_space<vmem>>, vector<1x128xf32>
    tpu.vector_store %arg3[%c12_62, %c0_63], %63 {strides = array<i32>} : memref<27x128xf32, #tpu.memory_space<vmem>>, vector<1x128xf32>,
    %c13 = arith.constant 13 : index
    %c0_64 = arith.constant 0 : index
    %c0_65 = arith.constant 0 : index
    %65 = vector.load %arg2[%c13, %c0_64, %c0_65] : memref<27x4x128xf32, #tpu.memory_space<vmem>>, vector<1x4x128xf32>
    %66 = vector.shape_cast %65 : vector<1x4x128xf32> to vector<4x128xf32>
    %cst_66 = arith.constant dense<0.000000e+00> : vector<128xf32>
    %67 = vector.multi_reduction <add>, %66, %cst_66 [0] : vector<4x128xf32> to vector<128xf32>
    %68 = vector.shape_cast %67 : vector<128xf32> to vector<1x128xf32>
    %c13_67 = arith.constant 13 : index
    %c0_68 = arith.constant 0 : index
    %69 = vector.load %arg3[%c13_67, %c0_68] : memref<27x128xf32, #tpu.memory_space<vmem>>, vector<1x128xf32>
    tpu.vector_store %arg3[%c13_67, %c0_68], %68 {strides = array<i32>} : memref<27x128xf32, #tpu.memory_space<vmem>>, vector<1x128xf32>,
    %c14 = arith.constant 14 : index
    %c0_69 = arith.constant 0 : index
    %c0_70 = arith.constant 0 : index
    %70 = vector.load %arg2[%c14, %c0_69, %c0_70] : memref<27x4x128xf32, #tpu.memory_space<vmem>>, vector<1x4x128xf32>
    %71 = vector.shape_cast %70 : vector<1x4x128xf32> to vector<4x128xf32>
    %cst_71 = arith.constant dense<0.000000e+00> : vector<128xf32>
    %72 = vector.multi_reduction <add>, %71, %cst_71 [0] : vector<4x128xf32> to vector<128xf32>
    %73 = vector.shape_cast %72 : vector<128xf32> to vector<1x128xf32>
    %c14_72 = arith.constant 14 : index
    %c0_73 = arith.constant 0 : index
    %74 = vector.load %arg3[%c14_72, %c0_73] : memref<27x128xf32, #tpu.memory_space<vmem>>, vector<1x128xf32>
    tpu.vector_store %arg3[%c14_72, %c0_73], %73 {strides = array<i32>} : memref<27x128xf32, #tpu.memory_space<vmem>>, vector<1x128xf32>,
    %c15 = arith.constant 15 : index
    %c0_74 = arith.constant 0 : index
    %c0_75 = arith.constant 0 : index
    %75 = vector.load %arg2[%c15, %c0_74, %c0_75] : memref<27x4x128xf32, #tpu.memory_space<vmem>>, vector<1x4x128xf32>
    %76 = vector.shape_cast %75 : vector<1x4x128xf32> to vector<4x128xf32>
    %cst_76 = arith.constant dense<0.000000e+00> : vector<128xf32>
    %77 = vector.multi_reduction <add>, %76, %cst_76 [0] : vector<4x128xf32> to vector<128xf32>
    %78 = vector.shape_cast %77 : vector<128xf32> to vector<1x128xf32>
    %c15_77 = arith.constant 15 : index
    %c0_78 = arith.constant 0 : index
    %79 = vector.load %arg3[%c15_77, %c0_78] : memref<27x128xf32, #tpu.memory_space<vmem>>, vector<1x128xf32>
    tpu.vector_store %arg3[%c15_77, %c0_78], %78 {strides = array<i32>} : memref<27x128xf32, #tpu.memory_space<vmem>>, vector<1x128xf32>,
    %c16 = arith.constant 16 : index
    %c0_79 = arith.constant 0 : index
    %c0_80 = arith.constant 0 : index
    %80 = vector.load %arg2[%c16, %c0_79, %c0_80] : memref<27x4x128xf32, #tpu.memory_space<vmem>>, vector<1x4x128xf32>
    %81 = vector.shape_cast %80 : vector<1x4x128xf32> to vector<4x128xf32>
    %cst_81 = arith.constant dense<0.000000e+00> : vector<128xf32>
    %82 = vector.multi_reduction <add>, %81, %cst_81 [0] : vector<4x128xf32> to vector<128xf32>
    %83 = vector.shape_cast %82 : vector<128xf32> to vector<1x128xf32>
    %c16_82 = arith.constant 16 : index
    %c0_83 = arith.constant 0 : index
    %84 = vector.load %arg3[%c16_82, %c0_83] : memref<27x128xf32, #tpu.memory_space<vmem>>, vector<1x128xf32>
    tpu.vector_store %arg3[%c16_82, %c0_83], %83 {strides = array<i32>} : memref<27x128xf32, #tpu.memory_space<vmem>>, vector<1x128xf32>,
    %c17 = arith.constant 17 : index
    %c0_84 = arith.constant 0 : index
    %c0_85 = arith.constant 0 : index
    %85 = vector.load %arg2[%c17, %c0_84, %c0_85] : memref<27x4x128xf32, #tpu.memory_space<vmem>>, vector<1x4x128xf32>
    %86 = vector.shape_cast %85 : vector<1x4x128xf32> to vector<4x128xf32>
    %cst_86 = arith.constant dense<0.000000e+00> : vector<128xf32>
    %87 = vector.multi_reduction <add>, %86, %cst_86 [0] : vector<4x128xf32> to vector<128xf32>
    %88 = vector.shape_cast %87 : vector<128xf32> to vector<1x128xf32>
    %c17_87 = arith.constant 17 : index
    %c0_88 = arith.constant 0 : index
    %89 = vector.load %arg3[%c17_87, %c0_88] : memref<27x128xf32, #tpu.memory_space<vmem>>, vector<1x128xf32>
    tpu.vector_store %arg3[%c17_87, %c0_88], %88 {strides = array<i32>} : memref<27x128xf32, #tpu.memory_space<vmem>>, vector<1x128xf32>,
    %c18 = arith.constant 18 : index
    %c0_89 = arith.constant 0 : index
    %c0_90 = arith.constant 0 : index
    %90 = vector.load %arg2[%c18, %c0_89, %c0_90] : memref<27x4x128xf32, #tpu.memory_space<vmem>>, vector<1x4x128xf32>
    %91 = vector.shape_cast %90 : vector<1x4x128xf32> to vector<4x128xf32>
    %cst_91 = arith.constant dense<0.000000e+00> : vector<128xf32>
    %92 = vector.multi_reduction <add>, %91, %cst_91 [0] : vector<4x128xf32> to vector<128xf32>
    %93 = vector.shape_cast %92 : vector<128xf32> to vector<1x128xf32>
    %c18_92 = arith.constant 18 : index
    %c0_93 = arith.constant 0 : index
    %94 = vector.load %arg3[%c18_92, %c0_93] : memref<27x128xf32, #tpu.memory_space<vmem>>, vector<1x128xf32>
    tpu.vector_store %arg3[%c18_92, %c0_93], %93 {strides = array<i32>} : memref<27x128xf32, #tpu.memory_space<vmem>>, vector<1x128xf32>,
    %c19 = arith.constant 19 : index
    %c0_94 = arith.constant 0 : index
    %c0_95 = arith.constant 0 : index
    %95 = vector.load %arg2[%c19, %c0_94, %c0_95] : memref<27x4x128xf32, #tpu.memory_space<vmem>>, vector<1x4x128xf32>
    %96 = vector.shape_cast %95 : vector<1x4x128xf32> to vector<4x128xf32>
    %cst_96 = arith.constant dense<0.000000e+00> : vector<128xf32>
    %97 = vector.multi_reduction <add>, %96, %cst_96 [0] : vector<4x128xf32> to vector<128xf32>
    %98 = vector.shape_cast %97 : vector<128xf32> to vector<1x128xf32>
    %c19_97 = arith.constant 19 : index
    %c0_98 = arith.constant 0 : index
    %99 = vector.load %arg3[%c19_97, %c0_98] : memref<27x128xf32, #tpu.memory_space<vmem>>, vector<1x128xf32>
    tpu.vector_store %arg3[%c19_97, %c0_98], %98 {strides = array<i32>} : memref<27x128xf32, #tpu.memory_space<vmem>>, vector<1x128xf32>,
    %c20 = arith.constant 20 : index
    %c0_99 = arith.constant 0 : index
    %c0_100 = arith.constant 0 : index
    %100 = vector.load %arg2[%c20, %c0_99, %c0_100] : memref<27x4x128xf32, #tpu.memory_space<vmem>>, vector<1x4x128xf32>
    %101 = vector.shape_cast %100 : vector<1x4x128xf32> to vector<4x128xf32>
    %cst_101 = arith.constant dense<0.000000e+00> : vector<128xf32>
    %102 = vector.multi_reduction <add>, %101, %cst_101 [0] : vector<4x128xf32> to vector<128xf32>
    %103 = vector.shape_cast %102 : vector<128xf32> to vector<1x128xf32>
    %c20_102 = arith.constant 20 : index
    %c0_103 = arith.constant 0 : index
    %104 = vector.load %arg3[%c20_102, %c0_103] : memref<27x128xf32, #tpu.memory_space<vmem>>, vector<1x128xf32>
    tpu.vector_store %arg3[%c20_102, %c0_103], %103 {strides = array<i32>} : memref<27x128xf32, #tpu.memory_space<vmem>>, vector<1x128xf32>,
    %c21 = arith.constant 21 : index
    %c0_104 = arith.constant 0 : index
    %c0_105 = arith.constant 0 : index
    %105 = vector.load %arg2[%c21, %c0_104, %c0_105] : memref<27x4x128xf32, #tpu.memory_space<vmem>>, vector<1x4x128xf32>
    %106 = vector.shape_cast %105 : vector<1x4x128xf32> to vector<4x128xf32>
    %cst_106 = arith.constant dense<0.000000e+00> : vector<128xf32>
    %107 = vector.multi_reduction <add>, %106, %cst_106 [0] : vector<4x128xf32> to vector<128xf32>
    %108 = vector.shape_cast %107 : vector<128xf32> to vector<1x128xf32>
    %c21_107 = arith.constant 21 : index
    %c0_108 = arith.constant 0 : index
    %109 = vector.load %arg3[%c21_107, %c0_108] : memref<27x128xf32, #tpu.memory_space<vmem>>, vector<1x128xf32>
    tpu.vector_store %arg3[%c21_107, %c0_108], %108 {strides = array<i32>} : memref<27x128xf32, #tpu.memory_space<vmem>>, vector<1x128xf32>,
    %c22 = arith.constant 22 : index
    %c0_109 = arith.constant 0 : index
    %c0_110 = arith.constant 0 : index
    %110 = vector.load %arg2[%c22, %c0_109, %c0_110] : memref<27x4x128xf32, #tpu.memory_space<vmem>>, vector<1x4x128xf32>
    %111 = vector.shape_cast %110 : vector<1x4x128xf32> to vector<4x128xf32>
    %cst_111 = arith.constant dense<0.000000e+00> : vector<128xf32>
    %112 = vector.multi_reduction <add>, %111, %cst_111 [0] : vector<4x128xf32> to vector<128xf32>
    %113 = vector.shape_cast %112 : vector<128xf32> to vector<1x128xf32>
    %c22_112 = arith.constant 22 : index
    %c0_113 = arith.constant 0 : index
    %114 = vector.load %arg3[%c22_112, %c0_113] : memref<27x128xf32, #tpu.memory_space<vmem>>, vector<1x128xf32>
    tpu.vector_store %arg3[%c22_112, %c0_113], %113 {strides = array<i32>} : memref<27x128xf32, #tpu.memory_space<vmem>>, vector<1x128xf32>,
    %c23 = arith.constant 23 : index
    %c0_114 = arith.constant 0 : index
    %c0_115 = arith.constant 0 : index
    %115 = vector.load %arg2[%c23, %c0_114, %c0_115] : memref<27x4x128xf32, #tpu.memory_space<vmem>>, vector<1x4x128xf32>
    %116 = vector.shape_cast %115 : vector<1x4x128xf32> to vector<4x128xf32>
    %cst_116 = arith.constant dense<0.000000e+00> : vector<128xf32>
    %117 = vector.multi_reduction <add>, %116, %cst_116 [0] : vector<4x128xf32> to vector<128xf32>
    %118 = vector.shape_cast %117 : vector<128xf32> to vector<1x128xf32>
    %c23_117 = arith.constant 23 : index
    %c0_118 = arith.constant 0 : index
    %119 = vector.load %arg3[%c23_117, %c0_118] : memref<27x128xf32, #tpu.memory_space<vmem>>, vector<1x128xf32>
    tpu.vector_store %arg3[%c23_117, %c0_118], %118 {strides = array<i32>} : memref<27x128xf32, #tpu.memory_space<vmem>>, vector<1x128xf32>,
    %c24 = arith.constant 24 : index
    %c0_119 = arith.constant 0 : index
    %c0_120 = arith.constant 0 : index
    %120 = vector.load %arg2[%c24, %c0_119, %c0_120] : memref<27x4x128xf32, #tpu.memory_space<vmem>>, vector<1x4x128xf32>
    %121 = vector.shape_cast %120 : vector<1x4x128xf32> to vector<4x128xf32>
    %cst_121 = arith.constant dense<0.000000e+00> : vector<128xf32>
    %122 = vector.multi_reduction <add>, %121, %cst_121 [0] : vector<4x128xf32> to vector<128xf32>
    %123 = vector.shape_cast %122 : vector<128xf32> to vector<1x128xf32>
    %c24_122 = arith.constant 24 : index
    %c0_123 = arith.constant 0 : index
    %124 = vector.load %arg3[%c24_122, %c0_123] : memref<27x128xf32, #tpu.memory_space<vmem>>, vector<1x128xf32>
    tpu.vector_store %arg3[%c24_122, %c0_123], %123 {strides = array<i32>} : memref<27x128xf32, #tpu.memory_space<vmem>>, vector<1x128xf32>,
    %c25 = arith.constant 25 : index
    %c0_124 = arith.constant 0 : index
    %c0_125 = arith.constant 0 : index
    %125 = vector.load %arg2[%c25, %c0_124, %c0_125] : memref<27x4x128xf32, #tpu.memory_space<vmem>>, vector<1x4x128xf32>
    %126 = vector.shape_cast %125 : vector<1x4x128xf32> to vector<4x128xf32>
    %cst_126 = arith.constant dense<0.000000e+00> : vector<128xf32>
    %127 = vector.multi_reduction <add>, %126, %cst_126 [0] : vector<4x128xf32> to vector<128xf32>
    %128 = vector.shape_cast %127 : vector<128xf32> to vector<1x128xf32>
    %c25_127 = arith.constant 25 : index
    %c0_128 = arith.constant 0 : index
    %129 = vector.load %arg3[%c25_127, %c0_128] : memref<27x128xf32, #tpu.memory_space<vmem>>, vector<1x128xf32>
    tpu.vector_store %arg3[%c25_127, %c0_128], %128 {strides = array<i32>} : memref<27x128xf32, #tpu.memory_space<vmem>>, vector<1x128xf32>,
    %c26 = arith.constant 26 : index
    %c0_129 = arith.constant 0 : index
    %c0_130 = arith.constant 0 : index
    %130 = vector.load %arg2[%c26, %c0_129, %c0_130] : memref<27x4x128xf32, #tpu.memory_space<vmem>>, vector<1x4x128xf32>
    %131 = vector.shape_cast %130 : vector<1x4x128xf32> to vector<4x128xf32>
    %cst_131 = arith.constant dense<0.000000e+00> : vector<128xf32>
    %132 = vector.multi_reduction <add>, %131, %cst_131 [0] : vector<4x128xf32> to vector<128xf32>
    %133 = vector.shape_cast %132 : vector<128xf32> to vector<1x128xf32>
    %c26_132 = arith.constant 26 : index
    %c0_133 = arith.constant 0 : index
    %134 = vector.load %arg3[%c26_132, %c0_133] : memref<27x128xf32, #tpu.memory_space<vmem>>, vector<1x128xf32>
    tpu.vector_store %arg3[%c26_132, %c0_133], %133 {strides = array<i32>} : memref<27x128xf32, #tpu.memory_space<vmem>>, vector<1x128xf32>,
    return
  }
  func.func @transform_0(%arg0: i32, %arg1: i32) -> (i32, i32, i32) {
    %c0_i32 = arith.constant 0 : i32
    %c0_i32_0 = arith.constant 0 : i32
    return %arg0, %c0_i32, %arg1 : i32, i32, i32
  }
  func.func @transform_1(%arg0: i32, %arg1: i32) -> (i32, i32) {
    %c0_i32 = arith.constant 0 : i32
    return %arg0, %arg1 : i32, i32
  }
}

module attributes {stable_mosaic.version = 11 : i64} {
  func.func @_frame_kernel(%arg0: i32, %arg1: i32, %arg2: memref<27x128xf32, #tpu.memory_space<vmem>>, %arg3: memref<1x128xi32, #tpu.memory_space<vmem>>, %arg4: memref<24x128xf32, #tpu.memory_space<vmem>>) attributes {dimension_semantics = [#tpu.dimension_semantics<parallel>, #tpu.dimension_semantics<parallel>], iteration_bounds = array<i64: 1, 1>, scalar_prefetch = 0 : i64, scratch_operands = 0 : i64, tpu.core_type = #tpu.core_type<tc>, window_params = [{transform_indices = @transform_0, window_bounds = array<i64: 27, 128>}, {transform_indices = @transform_1, window_bounds = array<i64: 1, 128>}, {transform_indices = @transform_2, window_bounds = array<i64: 24, 128>}]} {
    %c24_i32 = arith.constant 24 : i32
    %0 = arith.muli %arg1, %c24_i32 : i32
    %c0_i32 = arith.constant 0 : i32
    %1 = arith.addi %0, %c0_i32 : i32
    %2 = arith.index_cast %1 : i32 to index
    %c0 = arith.constant 0 : index
    %3 = vector.load %arg2[%2, %c0] : memref<27x128xf32, #tpu.memory_space<vmem>>, vector<24x128xf32>
    %c1_i32 = arith.constant 1 : i32
    %4 = arith.addi %0, %c1_i32 : i32
    %5 = arith.index_cast %4 : i32 to index
    %c0_0 = arith.constant 0 : index
    %6 = vector.load %arg2[%5, %c0_0] : memref<27x128xf32, #tpu.memory_space<vmem>>, vector<24x128xf32>
    %c2_i32 = arith.constant 2 : i32
    %7 = arith.addi %0, %c2_i32 : i32
    %8 = arith.index_cast %7 : i32 to index
    %c0_1 = arith.constant 0 : index
    %9 = vector.load %arg2[%8, %c0_1] : memref<27x128xf32, #tpu.memory_space<vmem>>, vector<24x128xf32>
    %c3_i32 = arith.constant 3 : i32
    %10 = arith.addi %0, %c3_i32 : i32
    %11 = arith.index_cast %10 : i32 to index
    %c0_2 = arith.constant 0 : index
    %12 = vector.load %arg2[%11, %c0_2] : memref<27x128xf32, #tpu.memory_space<vmem>>, vector<24x128xf32>
    %13 = arith.addf %3, %6 : vector<24x128xf32>
    %14 = arith.addf %13, %9 : vector<24x128xf32>
    %15 = arith.addf %14, %12 : vector<24x128xf32>
    %cst = arith.constant 8.000000e+00 : f32
    %16 = vector.broadcast %cst : f32 to vector<24x128xf32>
    %17 = arith.cmpf ogt, %15, %16 : vector<24x128xf32>
    %18 = arith.extui %17 : vector<24x128xi1> to vector<24x128xi32>
    %19 = arith.sitofp %18 : vector<24x128xi32> to vector<24x128xf32>
    %20 = tpu.iota {dimensions = array<i32: 0>} : vector<24x1xi32>
    %21 = vector.broadcast %0 : i32 to vector<24x1xi32>
    %22 = arith.addi %21, %20 : vector<24x1xi32>
    %c0_3 = arith.constant 0 : index
    %c0_4 = arith.constant 0 : index
    %23 = vector.load %arg3[%c0_3, %c0_4] : memref<1x128xi32, #tpu.memory_space<vmem>>, vector<1x128xi32>
    %24 = vector.broadcast %22 : vector<24x1xi32> to vector<24x128xi32>
    %25 = vector.broadcast %23 : vector<1x128xi32> to vector<24x128xi32>
    %26 = arith.cmpi slt, %24, %25 : vector<24x128xi32>
    %cst_5 = arith.constant 0.000000e+00 : f32
    %27 = vector.broadcast %cst_5 : f32 to vector<24x128xf32>
    %28 = arith.select %26, %19, %27 : vector<24x128xi1>, vector<24x128xf32>
    %c0_6 = arith.constant 0 : index
    %c0_7 = arith.constant 0 : index
    %29 = vector.load %arg4[%c0_6, %c0_7] : memref<24x128xf32, #tpu.memory_space<vmem>>, vector<24x128xf32>
    tpu.vector_store %arg4[%c0_6, %c0_7], %28 {strides = array<i32>} : memref<24x128xf32, #tpu.memory_space<vmem>>, vector<24x128xf32>,
    return
  }
  func.func @transform_0(%arg0: i32, %arg1: i32) -> (i32, i32) {
    %c0_i32 = arith.constant 0 : i32
    %c0_i32_0 = arith.constant 0 : i32
    return %c0_i32, %arg0 : i32, i32
  }
  func.func @transform_1(%arg0: i32, %arg1: i32) -> (i32, i32) {
    %c0_i32 = arith.constant 0 : i32
    %c0_i32_0 = arith.constant 0 : i32
    return %c0_i32, %arg0 : i32, i32
  }
  func.func @transform_2(%arg0: i32, %arg1: i32) -> (i32, i32) {
    %c0_i32 = arith.constant 0 : i32
    return %arg1, %arg0 : i32, i32
  }
}

</mosaic_0001>

<llo_original>
// kernel: label_aggregate.3
$region0: #{label_aggregate.3}
  #allocation0 [shape = 'u32[]', space=smem, size = 0x4, offset = 0x4, fixed_abs, tag = 'smem constant byte address 0x4 - core index']
  #allocation1 [shape = 'u32[72,128]{1,0:T(1,128)}', space=vmem, size = 0x9000, scoped, tag = 'internal scratch']
  %s0 = inlined_call_operand.vmem [shape: f32[27,128], index: 0, kind: input, shape index: {}]
  %s1 = inlined_call_operand.vmem [shape: s32[1,128], index: 1, kind: input, shape index: {}]
  %s2 = inlined_call_operand.vmem [shape: f32[24,128], index: 2, kind: output, shape index: {}]
  %s3 = sld [smem:[#allocation0]]
  $region18: #{label_aggregate.3} parent=0
    _
  %s5 = ssub.s32 1, %s3
  %s6 = scalar_select 0, %s5, %s3
  // Predicated region
  $region2: #{label_aggregate.3} parent=0 // pred_check
    _
  $region3: #{label_aggregate.3} parent=0 // pred_check_branch
    %8 = sbr.rel (0) target = $region5
  $region4: #{label_aggregate.3} parent=0 // pred_region
    _
  $region5: #{label_aggregate.3} parent=0 // pred_fallthru
    _
  // Predicated region
  $region6: #{label_aggregate.3} parent=0 // pred_check
    _
  $region7: #{label_aggregate.3} parent=0 // pred_check_branch
    %10 = sbr.rel (0) target = $region9
  $region8: #{label_aggregate.3} parent=0 // pred_region
    _
  $region9: #{label_aggregate.3} parent=0 // pred_fallthru
    _
  %s11 = smul.u32 0, 24
  %s12 = scalar_lea.vmem %s0, %s11
  %v13 = vld [vmem:[%s12] sm:$0xff]
  %v14 = vld [vmem:[%s12 + $0x8] sm:$0xff]
  %v15 = vld [vmem:[%s12 + $0x10] sm:$0xff]
  %s16 = sadd.s32 %s11, 1
  %s17 = scalar_lea.vmem %s0, %s16
  %v18 = vld [vmem:[%s17] sm:$0xff]
  %v19 = vld [vmem:[%s17 + $0x8] sm:$0xff]
  %v20 = vld [vmem:[%s17 + $0x10] sm:$0xff]
  %s21 = sadd.s32 %s11, 2
  %s22 = scalar_lea.vmem %s0, %s21
  %v23 = vld [vmem:[%s22] sm:$0xff]
  %v24 = vld [vmem:[%s22 + $0x8] sm:$0xff]
  %v25 = vld [vmem:[%s22 + $0x10] sm:$0xff]
  %s26 = sadd.s32 %s11, 3
  %s27 = scalar_lea.vmem %s0, %s26
  %v28 = vld [vmem:[%s27] sm:$0xff]
  %v29 = vld [vmem:[%s27 + $0x8] sm:$0xff]
  %v30 = vld [vmem:[%s27 + $0x10] sm:$0xff]
  %v31 = vadd.f32 %v13, %v18
  %v32 = vadd.f32 %v14, %v19
  %v33 = vadd.f32 %v15, %v20
  %v34 = vadd.f32 %v31, %v23
  %v35 = vadd.f32 %v32, %v24
  %v36 = vadd.f32 %v33, %v25
  %v37 = vadd.f32 %v34, %v28
  %v38 = vadd.f32 %v35, %v29
  %v39 = vadd.f32 %v36, %v30
  %vm40 = vcmp.gt.f32.partialorder %v37, 8.0
  %vm41 = vcmp.gt.f32.partialorder %v38, 8.0
  %vm42 = vcmp.gt.f32.partialorder %v39, 8.0
  %v43 = vsel %vm40, 1, 0
  %v44 = vsel %vm41, 1, 0
  %v45 = vsel %vm42, 1, 0
  %v46 = vcvt.s32.f32 %v43
  %v47 = vcvt.s32.f32 %v44
  %v48 = vcvt.s32.f32 %v45
  %v49 = vlaneseq
  %v50 = vshrl.u32 %v49, 7
  %v51 = vadd.s32 %v50, 8
  %v52 = vadd.s32 %v50, 16
  %v53 = vstv %s11
  %v54 = vadd.s32 %v53, %v50
  %v55 = vadd.s32 %v53, %v51
  %v56 = vadd.s32 %v53, %v52
  %v57 = vld [vmem:[%s1] sm:$0x1]
  %v58 = vperm.slane %v57, 0
  %vm59 = vcmp.lt.s32.totalorder %v54, %v58
  %vm60 = vcmp.lt.s32.totalorder %v55, %v58
  %vm61 = vcmp.lt.s32.totalorder %v56, %v58
  %v62 = vsel %vm59, %v46, 0.0
  %v63 = vsel %vm60, %v47, 0.0
  %v64 = vsel %vm61, %v48, 0.0
  %65 = vst [vmem:[%s2] sm:$0xff] %v62
  %66 = vst [vmem:[%s2 + $0x8] sm:$0xff] %v63
  %67 = vst [vmem:[%s2 + $0x10] sm:$0xff] %v64
  // Predicated region
  $region10: #{label_aggregate.3} parent=0 // pred_check
    _
  $region11: #{label_aggregate.3} parent=0 // pred_check_branch
    %69 = sbr.rel (0) target = $region13
  $region12: #{label_aggregate.3} parent=0 // pred_region
    _
  $region13: #{label_aggregate.3} parent=0 // pred_fallthru
    _
  // Predicated region
  $region14: #{label_aggregate.3} parent=0 // pred_check
    _
  $region15: #{label_aggregate.3} parent=0 // pred_check_branch
    %71 = sbr.rel (0) target = $region17
  $region16: #{label_aggregate.3} parent=0 // pred_region
    _
  $region17: #{label_aggregate.3} parent=0 // pred_fallthru
    _

// kernel: label_aggregate.2
$region0: #{label_aggregate.2}
  #allocation0 [shape = 'u32[]', space=smem, size = 0x4, offset = 0x4, fixed_abs, tag = 'smem constant byte address 0x4 - core index']
  #allocation1 [shape = 'u32[72,128]{1,0:T(1,128)}', space=vmem, size = 0x9000, scoped, tag = 'internal scratch']
  %s0 = inlined_call_operand.vmem [shape: f32[27,4,128], index: 0, kind: input, shape index: {}]
  %s1 = inlined_call_operand.vmem [shape: f32[27,128], index: 1, kind: output, shape index: {}]
  %s2 = sld [smem:[#allocation0]]
  $region14: #{label_aggregate.2} parent=0
    _
  %s4 = ssub.s32 1, %s2
  %s5 = scalar_select 0, %s4, %s2
  // Predicated region
  $region2: #{label_aggregate.2} parent=0 // pred_check
    _
  $region3: #{label_aggregate.2} parent=0 // pred_check_branch
    %7 = sbr.rel (0) target = $region5
  $region4: #{label_aggregate.2} parent=0 // pred_region
    _
  $region5: #{label_aggregate.2} parent=0 // pred_fallthru
    _
  %v8 = vld [vmem:[%s0] sm:$0xf]
  %vm9 = vcmask 1043456
  %v10 = vsel %vm9, %v8, 0.0
  %v11 = vrot.slane %v10, 4
  %v12 = vadd.f32 %v10, %v11
  %v13 = vrot.slane %v12, 2
  %v14 = vadd.f32 %v12, %v13
  %v15 = vrot.slane %v14, 1
  %v16 = vadd.f32 %v14, %v15
  %17 = vst [vmem:[%s1] sm:$0x1] %v16
  %s18 = scalar_lea.vmem %s0, 4
  %v19 = vld [vmem:[%s18] sm:$0xf]
  %v20 = vsel %vm9, %v19, 0.0
  %v21 = vrot.slane %v20, 4
  %v22 = vadd.f32 %v20, %v21
  %v23 = vrot.slane %v22, 2
  %v24 = vadd.f32 %v22, %v23
  %v25 = vrot.slane %v24, 1
  %v26 = vadd.f32 %v24, %v25
  %27 = vst [vmem:[%s1 + $0x1] sm:$0x1] %v26
  %s28 = scalar_lea.vmem %s0, 8
  %v29 = vld [vmem:[%s28] sm:$0xf]
  %v30 = vsel %vm9, %v29, 0.0
  %v31 = vrot.slane %v30, 4
  %v32 = vadd.f32 %v30, %v31
  %v33 = vrot.slane %v32, 2
  %v34 = vadd.f32 %v32, %v33
  %v35 = vrot.slane %v34, 1
  %v36 = vadd.f32 %v34, %v35
  %37 = vst [vmem:[%s1 + $0x2] sm:$0x1] %v36
  %s38 = scalar_lea.vmem %s0, 12
  %v39 = vld [vmem:[%s38] sm:$0xf]
  %v40 = vsel %vm9, %v39, 0.0
  %v41 = vrot.slane %v40, 4
  %v42 = vadd.f32 %v40, %v41
  %v43 = vrot.slane %v42, 2
  %v44 = vadd.f32 %v42, %v43
  %v45 = vrot.slane %v44, 1
  %v46 = vadd.f32 %v44, %v45
  %47 = vst [vmem:[%s1 + $0x3] sm:$0x1] %v46
  %s48 = scalar_lea.vmem %s0, 16
  %v49 = vld [vmem:[%s48] sm:$0xf]
  %v50 = vsel %vm9, %v49, 0.0
  %v51 = vrot.slane %v50, 4
  %v52 = vadd.f32 %v50, %v51
  %v53 = vrot.slane %v52, 2
  %v54 = vadd.f32 %v52, %v53
  %v55 = vrot.slane %v54, 1
  %v56 = vadd.f32 %v54, %v55
  %57 = vst [vmem:[%s1 + $0x4] sm:$0x1] %v56
  %s58 = scalar_lea.vmem %s0, 20
  %v59 = vld [vmem:[%s58] sm:$0xf]
  %v60 = vsel %vm9, %v59, 0.0
  %v61 = vrot.slane %v60, 4
  %v62 = vadd.f32 %v60, %v61
  %v63 = vrot.slane %v62, 2
  %v64 = vadd.f32 %v62, %v63
  %v65 = vrot.slane %v64, 1
  %v66 = vadd.f32 %v64, %v65
  %67 = vst [vmem:[%s1 + $0x5] sm:$0x1] %v66
  %s68 = scalar_lea.vmem %s0, 24
  %v69 = vld [vmem:[%s68] sm:$0xf]
  %v70 = vsel %vm9, %v69, 0.0
  %v71 = vrot.slane %v70, 4
  %v72 = vadd.f32 %v70, %v71
  %v73 = vrot.slane %v72, 2
  %v74 = vadd.f32 %v72, %v73
  %v75 = vrot.slane %v74, 1
  %v76 = vadd.f32 %v74, %v75
  %77 = vst [vmem:[%s1 + $0x6] sm:$0x1] %v76
  %s78 = scalar_lea.vmem %s0, 28
  %v79 = vld [vmem:[%s78] sm:$0xf]
  %v80 = vsel %vm9, %v79, 0.0
  %v81 = vrot.slane %v80, 4
  %v82 = vadd.f32 %v80, %v81
  %v83 = vrot.slane %v82, 2
  %v84 = vadd.f32 %v82, %v83
  %v85 = vrot.slane %v84, 1
  %v86 = vadd.f32 %v84, %v85
  %87 = vst [vmem:[%s1 + $0x7] sm:$0x1] %v86
  %s88 = scalar_lea.vmem %s0, 32
  %v89 = vld [vmem:[%s88] sm:$0xf]
  %v90 = vsel %vm9, %v89, 0.0
  %v91 = vrot.slane %v90, 4
  %v92 = vadd.f32 %v90, %v91
  %v93 = vrot.slane %v92, 2
  %v94 = vadd.f32 %v92, %v93
  %v95 = vrot.slane %v94, 1
  %v96 = vadd.f32 %v94, %v95
  %97 = vst [vmem:[%s1 + $0x8] sm:$0x1] %v96
  %s98 = scalar_lea.vmem %s0, 36
  %v99 = vld [vmem:[%s98] sm:$0xf]
  %v100 = vsel %vm9, %v99, 0.0
  %v101 = vrot.slane %v100, 4
  %v102 = vadd.f32 %v100, %v101
  %v103 = vrot.slane %v102, 2
  %v104 = vadd.f32 %v102, %v103
  %v105 = vrot.slane %v104, 1
  %v106 = vadd.f32 %v104, %v105
  %107 = vst [vmem:[%s1 + $0x9] sm:$0x1] %v106
  %s108 = scalar_lea.vmem %s0, 40
  %v109 = vld [vmem:[%s108] sm:$0xf]
  %v110 = vsel %vm9, %v109, 0.0
  %v111 = vrot.slane %v110, 4
  %v112 = vadd.f32 %v110, %v111
  %v113 = vrot.slane %v112, 2
  %v114 = vadd.f32 %v112, %v113
  %v115 = vrot.slane %v114, 1
  %v116 = vadd.f32 %v114, %v115
  %117 = vst [vmem:[%s1 + $0xa] sm:$0x1] %v116
  %s118 = scalar_lea.vmem %s0, 44
  %v119 = vld [vmem:[%s118] sm:$0xf]
  %v120 = vsel %vm9, %v119, 0.0
  %v121 = vrot.slane %v120, 4
  %v122 = vadd.f32 %v120, %v121
  %v123 = vrot.slane %v122, 2
  %v124 = vadd.f32 %v122, %v123
  %v125 = vrot.slane %v124, 1
  %v126 = vadd.f32 %v124, %v125
  %127 = vst [vmem:[%s1 + $0xb] sm:$0x1] %v126
  %s128 = scalar_lea.vmem %s0, 48
  %v129 = vld [vmem:[%s128] sm:$0xf]
  %v130 = vsel %vm9, %v129, 0.0
  %v131 = vrot.slane %v130, 4
  %v132 = vadd.f32 %v130, %v131
  %v133 = vrot.slane %v132, 2
  %v134 = vadd.f32 %v132, %v133
  %v135 = vrot.slane %v134, 1
  %v136 = vadd.f32 %v134, %v135
  %137 = vst [vmem:[%s1 + $0xc] sm:$0x1] %v136
  %s138 = scalar_lea.vmem %s0, 52
  %v139 = vld [vmem:[%s138] sm:$0xf]
  %v140 = vsel %vm9, %v139, 0.0
  %v141 = vrot.slane %v140, 4
  %v142 = vadd.f32 %v140, %v141
  %v143 = vrot.slane %v142, 2
  %v144 = vadd.f32 %v142, %v143
  %v145 = vrot.slane %v144, 1
  %v146 = vadd.f32 %v144, %v145
  %147 = vst [vmem:[%s1 + $0xd] sm:$0x1] %v146
  %s148 = scalar_lea.vmem %s0, 56
  %v149 = vld [vmem:[%s148] sm:$0xf]
  %v150 = vsel %vm9, %v149, 0.0
  %v151 = vrot.slane %v150, 4
  %v152 = vadd.f32 %v150, %v151
  %v153 = vrot.slane %v152, 2
  %v154 = vadd.f32 %v152, %v153
  %v155 = vrot.slane %v154, 1
  %v156 = vadd.f32 %v154, %v155
  %157 = vst [vmem:[%s1 + $0xe] sm:$0x1] %v156
  %s158 = scalar_lea.vmem %s0, 60
  %v159 = vld [vmem:[%s158] sm:$0xf]
  %v160 = vsel %vm9, %v159, 0.0
  %v161 = vrot.slane %v160, 4
  %v162 = vadd.f32 %v160, %v161
  %v163 = vrot.slane %v162, 2
  %v164 = vadd.f32 %v162, %v163
  %v165 = vrot.slane %v164, 1
  %v166 = vadd.f32 %v164, %v165
  %167 = vst [vmem:[%s1 + $0xf] sm:$0x1] %v166
  %s168 = scalar_lea.vmem %s0, 64
  %v169 = vld [vmem:[%s168] sm:$0xf]
  %v170 = vsel %vm9, %v169, 0.0
  %v171 = vrot.slane %v170, 4
  %v172 = vadd.f32 %v170, %v171
  %v173 = vrot.slane %v172, 2
  %v174 = vadd.f32 %v172, %v173
  %v175 = vrot.slane %v174, 1
  %v176 = vadd.f32 %v174, %v175
  %177 = vst [vmem:[%s1 + $0x10] sm:$0x1] %v176
  %s178 = scalar_lea.vmem %s0, 68
  %v179 = vld [vmem:[%s178] sm:$0xf]
  %v180 = vsel %vm9, %v179, 0.0
  %v181 = vrot.slane %v180, 4
  %v182 = vadd.f32 %v180, %v181
  %v183 = vrot.slane %v182, 2
  %v184 = vadd.f32 %v182, %v183
  %v185 = vrot.slane %v184, 1
  %v186 = vadd.f32 %v184, %v185
  %187 = vst [vmem:[%s1 + $0x11] sm:$0x1] %v186
  %s188 = scalar_lea.vmem %s0, 72
  %v189 = vld [vmem:[%s188] sm:$0xf]
  %v190 = vsel %vm9, %v189, 0.0
  %v191 = vrot.slane %v190, 4
  %v192 = vadd.f32 %v190, %v191
  %v193 = vrot.slane %v192, 2
  %v194 = vadd.f32 %v192, %v193
  %v195 = vrot.slane %v194, 1
  %v196 = vadd.f32 %v194, %v195
  %197 = vst [vmem:[%s1 + $0x12] sm:$0x1] %v196
  %s198 = scalar_lea.vmem %s0, 76
  %v199 = vld [vmem:[%s198] sm:$0xf]
  %v200 = vsel %vm9, %v199, 0.0
  %v201 = vrot.slane %v200, 4
  %v202 = vadd.f32 %v200, %v201
  %v203 = vrot.slane %v202, 2
  %v204 = vadd.f32 %v202, %v203
  %v205 = vrot.slane %v204, 1
  %v206 = vadd.f32 %v204, %v205
  %207 = vst [vmem:[%s1 + $0x13] sm:$0x1] %v206
  %s208 = scalar_lea.vmem %s0, 80
  %v209 = vld [vmem:[%s208] sm:$0xf]
  %v210 = vsel %vm9, %v209, 0.0
  %v211 = vrot.slane %v210, 4
  %v212 = vadd.f32 %v210, %v211
  %v213 = vrot.slane %v212, 2
  %v214 = vadd.f32 %v212, %v213
  %v215 = vrot.slane %v214, 1
  %v216 = vadd.f32 %v214, %v215
  %217 = vst [vmem:[%s1 + $0x14] sm:$0x1] %v216
  %s218 = scalar_lea.vmem %s0, 84
  %v219 = vld [vmem:[%s218] sm:$0xf]
  %v220 = vsel %vm9, %v219, 0.0
  %v221 = vrot.slane %v220, 4
  %v222 = vadd.f32 %v220, %v221
  %v223 = vrot.slane %v222, 2
  %v224 = vadd.f32 %v222, %v223
  %v225 = vrot.slane %v224, 1
  %v226 = vadd.f32 %v224, %v225
  %227 = vst [vmem:[%s1 + $0x15] sm:$0x1] %v226
  %s228 = scalar_lea.vmem %s0, 88
  %v229 = vld [vmem:[%s228] sm:$0xf]
  %v230 = vsel %vm9, %v229, 0.0
  %v231 = vrot.slane %v230, 4
  %v232 = vadd.f32 %v230, %v231
  %v233 = vrot.slane %v232, 2
  %v234 = vadd.f32 %v232, %v233
  %v235 = vrot.slane %v234, 1
  %v236 = vadd.f32 %v234, %v235
  %237 = vst [vmem:[%s1 + $0x16] sm:$0x1] %v236
  %s238 = scalar_lea.vmem %s0, 92
  %v239 = vld [vmem:[%s238] sm:$0xf]
  %v240 = vsel %vm9, %v239, 0.0
  %v241 = vrot.slane %v240, 4
  %v242 = vadd.f32 %v240, %v241
  %v243 = vrot.slane %v242, 2
  %v244 = vadd.f32 %v242, %v243
  %v245 = vrot.slane %v244, 1
  %v246 = vadd.f32 %v244, %v245
  %247 = vst [vmem:[%s1 + $0x17] sm:$0x1] %v246
  %s248 = scalar_lea.vmem %s0, 96
  %v249 = vld [vmem:[%s248] sm:$0xf]
  %v250 = vsel %vm9, %v249, 0.0
  %v251 = vrot.slane %v250, 4
  %v252 = vadd.f32 %v250, %v251
  %v253 = vrot.slane %v252, 2
  %v254 = vadd.f32 %v252, %v253
  %v255 = vrot.slane %v254, 1
  %v256 = vadd.f32 %v254, %v255
  %257 = vst [vmem:[%s1 + $0x18] sm:$0x1] %v256
  %s258 = scalar_lea.vmem %s0, 100
  %v259 = vld [vmem:[%s258] sm:$0xf]
  %v260 = vsel %vm9, %v259, 0.0
  %v261 = vrot.slane %v260, 4
  %v262 = vadd.f32 %v260, %v261
  %v263 = vrot.slane %v262, 2
  %v264 = vadd.f32 %v262, %v263
  %v265 = vrot.slane %v264, 1
  %v266 = vadd.f32 %v264, %v265
  %267 = vst [vmem:[%s1 + $0x19] sm:$0x1] %v266
  %s268 = scalar_lea.vmem %s0, 104
  %v269 = vld [vmem:[%s268] sm:$0xf]
  %v270 = vsel %vm9, %v269, 0.0
  %v271 = vrot.slane %v270, 4
  %v272 = vadd.f32 %v270, %v271
  %v273 = vrot.slane %v272, 2
  %v274 = vadd.f32 %v272, %v273
  %v275 = vrot.slane %v274, 1
  %v276 = vadd.f32 %v274, %v275
  %277 = vst [vmem:[%s1 + $0x1a] sm:$0x1] %v276
  // Predicated region
  $region6: #{label_aggregate.2} parent=0 // pred_check
    _
  $region7: #{label_aggregate.2} parent=0 // pred_check_branch
    %279 = sbr.rel (0) target = $region9
  $region8: #{label_aggregate.2} parent=0 // pred_region
    _
  $region9: #{label_aggregate.2} parent=0 // pred_fallthru
    _
  // Predicated region
  $region10: #{label_aggregate.2} parent=0 // pred_check
    _
  $region11: #{label_aggregate.2} parent=0 // pred_check_branch
    %281 = sbr.rel (0) target = $region13
  $region12: #{label_aggregate.2} parent=0 // pred_region
    _
  $region13: #{label_aggregate.2} parent=0 // pred_fallthru
    _

</llo_original>
